<compile_context>
chip_gen: v7x
topology: tpu7x:2x2x1
jax: 0.10.0
libtpu: 0.0.40
codegen_flags: <defaults>
</compile_context>

<pallas_src>
import functools

import jax
import jax.numpy as jnp
from jax import lax
from jax.experimental import pallas as pl
from jax.experimental.pallas import tpu as pltpu


def _round_up(x, m):
    return ((x + m - 1) // m) * m


def two_tower_train_kernel(
    pq_ref, pc_ref,                          # pooled query / candidate tiles (TB, D) f32
    wq1_ref, bq1_ref, wq2_ref, bq2_ref,      # query-tower MLP params (weights bf16, biases f32)
    wc1_ref, bc1_ref, wc2_ref, bc2_ref,      # candidate-tower MLP params
    y_ref,                                   # labels tile (1, 1, TB) f32
    logits_ref, loss_ref,                    # outputs (1, 1, TB) f32 each
    *, true_batch, tile,
):
    f32, bf16 = jnp.float32, jnp.bfloat16

    def tower(x_f32, w1, b1, w2, b2):
        # bf16 MXU matmuls with f32 accumulation; bias add + ReLU in f32 on the VPU.
        h = jnp.dot(x_f32.astype(bf16), w1, preferred_element_type=f32) + b1
        h = jnp.maximum(h, 0.0)
        o = jnp.dot(h.astype(bf16), w2, preferred_element_type=f32) + b2
        return jnp.maximum(o, 0.0)                                   # (TB, H2) f32

    q = tower(pq_ref[...], wq1_ref[...], bq1_ref[...], wq2_ref[...], bq2_ref[...])
    c = tower(pc_ref[...], wc1_ref[...], bc1_ref[...], wc2_ref[...], bc2_ref[...])

    # Interaction: per-row dot product, produced lane-dense (batch on the lane axis) by
    # contracting (q*c) against a ones row on the MXU -> (1, TB) logits, no XLU relayout.
    prod = q * c                                                     # (TB, H2) f32
    ones = jnp.ones((1, prod.shape[1]), f32)
    z = lax.dot_general(ones, prod, (((1,), (1,)), ((), ())),
                        preferred_element_type=f32)                  # (1, TB)
    logits_ref[...] = z.reshape(logits_ref.shape)

    # BCEWithLogitsLoss per-element terms (numerically stable); mean finished in wrapper.
    y = y_ref[...].reshape(z.shape)
    per = jnp.maximum(z, 0.0) - z * y + jnp.log1p(jnp.exp(-jnp.abs(z)))
    if true_batch % tile:                    # static: mask padded rows of the last tile
        row = pl.program_id(0) * tile + lax.broadcasted_iota(jnp.int32, z.shape, 1)
        per = jnp.where(row < true_batch, per, 0.0)
    loss_ref[...] = per.reshape(loss_ref.shape)


def two_tower_train_task(pooled_q, pooled_c, params, labels, *, tb=1024):
    """Fused two-tower MLP + dot-product interaction + BCE loss (Pallas TPU).

    pooled_q, pooled_c : (B, D) pooled embeddings (f32)
    params             : dict of weights (in, out) and biases (1, out) -- see init_params
    labels             : (B,)
    Returns (loss, (loss_detached, logits (B,), labels)), like the torch module.
    """
    f32, bf16 = jnp.float32, jnp.bfloat16
    B, D = pooled_q.shape
    H1 = params["wq1"].shape[1]
    H2 = params["wq2"].shape[1]

    TB = min(tb, _round_up(B, 8))            # row tile (sublane aligned; 1024 for big B)
    B_pad = _round_up(B, TB)
    num_tiles = B_pad // TB

    def pad_rows(x):
        return jnp.pad(x, ((0, B_pad - B), (0, 0))) if B_pad != B else x

    # Stream pooled inputs at native f32 (cast to bf16 happens in-kernel, under the DMA).
    pq = pad_rows(pooled_q.astype(f32))
    pc = pad_rows(pooled_c.astype(f32))
    y = labels.astype(f32)
    if B_pad != B:
        y = jnp.pad(y, (0, B_pad - B))
    y3 = y.reshape(num_tiles, 1, TB)         # lane-dense labels (free contiguous reshape)

    wq1 = params["wq1"].astype(bf16); wq2 = params["wq2"].astype(bf16)
    wc1 = params["wc1"].astype(bf16); wc2 = params["wc2"].astype(bf16)
    bq1 = params["bq1"].astype(f32);  bq2 = params["bq2"].astype(f32)
    bc1 = params["bc1"].astype(f32);  bc2 = params["bc2"].astype(f32)

    tiled2d = lambda r, c: pl.BlockSpec((r, c), lambda i: (i, 0))      # streamed per tile
    const2d = lambda r, c: pl.BlockSpec((r, c), lambda i: (0, 0))      # VMEM-resident params
    lane3d = pl.BlockSpec((1, 1, TB), lambda i: (i, 0, 0))             # lane-dense rows

    in_specs = [
        tiled2d(TB, D), tiled2d(TB, D),
        const2d(D, H1), const2d(1, H1), const2d(H1, H2), const2d(1, H2),
        const2d(D, H1), const2d(1, H1), const2d(H1, H2), const2d(1, H2),
        lane3d,
    ]
    out_specs = (lane3d, lane3d)
    out_shape = (jax.ShapeDtypeStruct((num_tiles, 1, TB), f32),   # logits (lane-dense)
                 jax.ShapeDtypeStruct((num_tiles, 1, TB), f32))   # per-element BCE terms

    flops = 2 * B_pad * (D * H1 + H1 * H2) * 2 + 6 * B_pad * H2
    transcendentals = 2 * B_pad
    bytes_accessed = (2 * B_pad * D * 4                      # pooled f32 streams
                      + 2 * (D * H1 + H1 * H2) * 2           # bf16 weights
                      + 2 * (H1 + H2) * 4                    # f32 biases
                      + 3 * B_pad * 4)                       # labels + logits + loss terms

    kernel = functools.partial(two_tower_train_kernel, true_batch=B, tile=TB)
    logits3, per3 = pl.pallas_call(
        kernel,
        grid=(num_tiles,),
        in_specs=in_specs,
        out_specs=out_specs,
        out_shape=out_shape,
        compiler_params=pltpu.CompilerParams(
            dimension_semantics=("parallel",),
            vmem_limit_bytes=32 * 1024 * 1024,
        ),
        cost_estimate=pl.CostEstimate(
            flops=int(flops),
            transcendentals=int(transcendentals),
            bytes_accessed=int(bytes_accessed)),
    )(pq, pc, wq1, bq1, wq2, bq2, wc1, bc1, wc2, bc2, y3)

    logits = logits3.reshape(B_pad)[:B]
    loss = jnp.sum(per3) / B                 # padded rows are zeroed in-kernel
    return loss, (lax.stop_gradient(loss), lax.stop_gradient(logits), labels)


# ---------------- parameter / input construction (glue, plain JAX) ----------------

def init_params(key, embedding_dim=128, layer_sizes=(128, 64)):
    ks = jax.random.split(key, 8)
    h1, h2 = layer_sizes
    s1 = 1.0 / jnp.sqrt(embedding_dim)
    s2 = 1.0 / jnp.sqrt(h1)
    return {
        "wq1": jax.random.normal(ks[0], (embedding_dim, h1), jnp.float32) * s1,
        "bq1": jax.random.normal(ks[1], (1, h1), jnp.float32) * 0.01,
        "wq2": jax.random.normal(ks[2], (h1, h2), jnp.float32) * s2,
        "bq2": jax.random.normal(ks[3], (1, h2), jnp.float32) * 0.01,
        "wc1": jax.random.normal(ks[4], (embedding_dim, h1), jnp.float32) * s1,
        "bc1": jax.random.normal(ks[5], (1, h1), jnp.float32) * 0.01,
        "wc2": jax.random.normal(ks[6], (h1, h2), jnp.float32) * s2,
        "bc2": jax.random.normal(ks[7], (1, h2), jnp.float32) * 0.01,
    }


def embedding_bag_pool(table, indices):
    # Sum-pooled EmbeddingBag over fixed-length bags (B, L) -> (B, D).
    # TODO(synk): torchrec KeyedJaggedTensor supports variable-length jagged bags; here we
    # use fixed-length synthetic bags and do the gather/sum in plain JAX (glue).
    return jnp.sum(table[indices], axis=1)


def reference_forward(pooled_q, pooled_c, p, labels):
    # Pure-JAX reference with the same bf16-MXU / f32-accumulate math as the kernel.
    f32, bf16 = jnp.float32, jnp.bfloat16

    def tower(x, w1, b1, w2, b2):
        h = jnp.maximum(jnp.dot(x.astype(bf16), w1.astype(bf16),
                                preferred_element_type=f32) + b1, 0.0)
        return jnp.maximum(jnp.dot(h.astype(bf16), w2.astype(bf16),
                                   preferred_element_type=f32) + b2, 0.0)

    q = tower(pooled_q, p["wq1"], p["bq1"], p["wq2"], p["bq2"])
    c = tower(pooled_c, p["wc1"], p["bc1"], p["wc2"], p["bc2"])
    logits = jnp.sum(q * c, axis=1)
    per = jnp.maximum(logits, 0.0) - logits * labels + jnp.log1p(jnp.exp(-jnp.abs(logits)))
    return jnp.mean(per), logits


if __name__ == "__main__":
    key = jax.random.PRNGKey(0)
    k_params, k_tq, k_tc, k_iq, k_ic, k_lab = jax.random.split(key, 6)

    B = 40     # batch (non-multiple of the tile -> exercises last-tile masking)
    D = 128    # embedding_dim (fixed by the module)
    V = 32     # synthetic vocab per embedding bag
    L = 4      # synthetic fixed bag length

    params = init_params(k_params, embedding_dim=D, layer_sizes=(128, 64))

    table_q = jax.random.normal(k_tq, (V, D), jnp.float32) * 0.1
    table_c = jax.random.normal(k_tc, (V, D), jnp.float32) * 0.1
    idx_q = jax.random.randint(k_iq, (B, L), 0, V)
    idx_c = jax.random.randint(k_ic, (B, L), 0, V)
    pooled_q = embedding_bag_pool(table_q, idx_q)
    pooled_c = embedding_bag_pool(table_c, idx_c)
    labels = jax.random.bernoulli(k_lab, 0.5, (B,)).astype(jnp.float32)

    # tb=16 keeps the demo tiny but still exercises a multi-tile "parallel" grid + padding.
    loss, (loss_det, logits, labels_out) = two_tower_train_task(
        pooled_q, pooled_c, params, labels, tb=16)
    jax.block_until_ready((loss, logits))

    ref_loss, ref_logits = reference_forward(pooled_q, pooled_c, params, labels)
    assert logits.shape == (B,)
    assert jnp.allclose(logits, ref_logits, atol=5e-3, rtol=1e-2), "logits mismatch"
    assert jnp.allclose(loss, ref_loss, atol=5e-3, rtol=1e-2), "loss mismatch"

    print("KERNEL_OK")
</pallas_src>

<mosaic_0001>
module attributes {stable_mosaic.version = 11 : i64} {
  func.func @two_tower_train_kernel(%arg0: i32, %arg1: memref<16x128xf32, #tpu.memory_space<vmem>>, %arg2: memref<16x128xf32, #tpu.memory_space<vmem>>, %arg3: memref<128x128xbf16, #tpu.memory_space<vmem>>, %arg4: memref<1x128xf32, #tpu.memory_space<vmem>>, %arg5: memref<128x64xbf16, #tpu.memory_space<vmem>>, %arg6: memref<1x64xf32, #tpu.memory_space<vmem>>, %arg7: memref<128x128xbf16, #tpu.memory_space<vmem>>, %arg8: memref<1x128xf32, #tpu.memory_space<vmem>>, %arg9: memref<128x64xbf16, #tpu.memory_space<vmem>>, %arg10: memref<1x64xf32, #tpu.memory_space<vmem>>, %arg11: memref<1x1x16xf32, #tpu.memory_space<vmem>>, %arg12: memref<1x1x16xf32, #tpu.memory_space<vmem>>, %arg13: memref<1x1x16xf32, #tpu.memory_space<vmem>>) attributes {dimension_semantics = [#tpu.dimension_semantics<parallel>], iteration_bounds = array<i64: 3>, scalar_prefetch = 0 : i64, scratch_operands = 0 : i64, tpu.core_type = #tpu.core_type<tc>, window_params = [{transform_indices = @transform_0, window_bounds = array<i64: 16, 128>}, {transform_indices = @transform_1, window_bounds = array<i64: 16, 128>}, {pipeline_mode = #tpu.pipeline_mode<synchronous>, transform_indices = @transform_2, window_bounds = array<i64: 128, 128>}, {pipeline_mode = #tpu.pipeline_mode<synchronous>, transform_indices = @transform_3, window_bounds = array<i64: 1, 128>}, {pipeline_mode = #tpu.pipeline_mode<synchronous>, transform_indices = @transform_4, window_bounds = array<i64: 128, 64>}, {pipeline_mode = #tpu.pipeline_mode<synchronous>, transform_indices = @transform_5, window_bounds = array<i64: 1, 64>}, {pipeline_mode = #tpu.pipeline_mode<synchronous>, transform_indices = @transform_6, window_bounds = array<i64: 128, 128>}, {pipeline_mode = #tpu.pipeline_mode<synchronous>, transform_indices = @transform_7, window_bounds = array<i64: 1, 128>}, {pipeline_mode = #tpu.pipeline_mode<synchronous>, transform_indices = @transform_8, window_bounds = array<i64: 128, 64>}, {pipeline_mode = #tpu.pipeline_mode<synchronous>, transform_indices = @transform_9, window_bounds = array<i64: 1, 64>}, {transform_indices = @transform_10, window_bounds = array<i64: 1, 1, 16>}, {transform_indices = @transform_11, window_bounds = array<i64: 1, 1, 16>}, {transform_indices = @transform_12, window_bounds = array<i64: 1, 1, 16>}]} {
    %c0 = arith.constant 0 : index
    %c0_0 = arith.constant 0 : index
    %0 = vector.load %arg1[%c0, %c0_0] : memref<16x128xf32, #tpu.memory_space<vmem>>, vector<16x128xf32>
    %c0_1 = arith.constant 0 : index
    %c0_2 = arith.constant 0 : index
    %1 = vector.load %arg3[%c0_1, %c0_2] : memref<128x128xbf16, #tpu.memory_space<vmem>>, vector<128x128xbf16>
    %c0_3 = arith.constant 0 : index
    %c0_4 = arith.constant 0 : index
    %2 = vector.load %arg4[%c0_3, %c0_4] : memref<1x128xf32, #tpu.memory_space<vmem>>, vector<1x128xf32>
    %c0_5 = arith.constant 0 : index
    %c0_6 = arith.constant 0 : index
    %3 = vector.load %arg5[%c0_5, %c0_6] : memref<128x64xbf16, #tpu.memory_space<vmem>>, vector<128x64xbf16>
    %c0_7 = arith.constant 0 : index
    %c0_8 = arith.constant 0 : index
    %4 = vector.load %arg6[%c0_7, %c0_8] : memref<1x64xf32, #tpu.memory_space<vmem>>, vector<1x64xf32>
    %5 = arith.truncf %0 : vector<16x128xf32> to vector<16x128xbf16>
    %cst = arith.constant dense<0.000000e+00> : vector<16x128xf32>
    %6 = tpu.matmul %5, %1, %cst {dimension_numbers = #tpu.dot_dimension_numbers<[1], [0], [0], [1], [0, 0, 1, 1], [], []>} : vector<16x128xbf16>, vector<128x128xbf16>, vector<16x128xf32> -> vector<16x128xf32>
    %7 = vector.broadcast %2 : vector<1x128xf32> to vector<16x128xf32>
    %8 = arith.addf %6, %7 : vector<16x128xf32>
    %cst_9 = arith.constant 0.000000e+00 : f32
    %9 = vector.broadcast %cst_9 : f32 to vector<16x128xf32>
    %10 = arith.maximumf %8, %9 : vector<16x128xf32>
    %11 = arith.truncf %10 : vector<16x128xf32> to vector<16x128xbf16>
    %cst_10 = arith.constant dense<0.000000e+00> : vector<16x64xf32>
    %12 = tpu.matmul %11, %3, %cst_10 {dimension_numbers = #tpu.dot_dimension_numbers<[1], [0], [0], [1], [0, 0, 1, 1], [], []>} : vector<16x128xbf16>, vector<128x64xbf16>, vector<16x64xf32> -> vector<16x64xf32>
    %13 = vector.broadcast %4 : vector<1x64xf32> to vector<16x64xf32>
    %14 = arith.addf %12, %13 : vector<16x64xf32>
    %cst_11 = arith.constant 0.000000e+00 : f32
    %15 = vector.broadcast %cst_11 : f32 to vector<16x64xf32>
    %16 = arith.maximumf %14, %15 : vector<16x64xf32>
    %c0_12 = arith.constant 0 : index
    %c0_13 = arith.constant 0 : index
    %17 = vector.load %arg2[%c0_12, %c0_13] : memref<16x128xf32, #tpu.memory_space<vmem>>, vector<16x128xf32>
    %c0_14 = arith.constant 0 : index
    %c0_15 = arith.constant 0 : index
    %18 = vector.load %arg7[%c0_14, %c0_15] : memref<128x128xbf16, #tpu.memory_space<vmem>>, vector<128x128xbf16>
    %c0_16 = arith.constant 0 : index
    %c0_17 = arith.constant 0 : index
    %19 = vector.load %arg8[%c0_16, %c0_17] : memref<1x128xf32, #tpu.memory_space<vmem>>, vector<1x128xf32>
    %c0_18 = arith.constant 0 : index
    %c0_19 = arith.constant 0 : index
    %20 = vector.load %arg9[%c0_18, %c0_19] : memref<128x64xbf16, #tpu.memory_space<vmem>>, vector<128x64xbf16>
    %c0_20 = arith.constant 0 : index
    %c0_21 = arith.constant 0 : index
    %21 = vector.load %arg10[%c0_20, %c0_21] : memref<1x64xf32, #tpu.memory_space<vmem>>, vector<1x64xf32>
    %22 = arith.truncf %17 : vector<16x128xf32> to vector<16x128xbf16>
    %cst_22 = arith.constant dense<0.000000e+00> : vector<16x128xf32>
    %23 = tpu.matmul %22, %18, %cst_22 {dimension_numbers = #tpu.dot_dimension_numbers<[1], [0], [0], [1], [0, 0, 1, 1], [], []>} : vector<16x128xbf16>, vector<128x128xbf16>, vector<16x128xf32> -> vector<16x128xf32>
    %24 = vector.broadcast %19 : vector<1x128xf32> to vector<16x128xf32>
    %25 = arith.addf %23, %24 : vector<16x128xf32>
    %cst_23 = arith.constant 0.000000e+00 : f32
    %26 = vector.broadcast %cst_23 : f32 to vector<16x128xf32>
    %27 = arith.maximumf %25, %26 : vector<16x128xf32>
    %28 = arith.truncf %27 : vector<16x128xf32> to vector<16x128xbf16>
    %cst_24 = arith.constant dense<0.000000e+00> : vector<16x64xf32>
    %29 = tpu.matmul %28, %20, %cst_24 {dimension_numbers = #tpu.dot_dimension_numbers<[1], [0], [0], [1], [0, 0, 1, 1], [], []>} : vector<16x128xbf16>, vector<128x64xbf16>, vector<16x64xf32> -> vector<16x64xf32>
    %30 = vector.broadcast %21 : vector<1x64xf32> to vector<16x64xf32>
    %31 = arith.addf %29, %30 : vector<16x64xf32>
    %cst_25 = arith.constant 0.000000e+00 : f32
    %32 = vector.broadcast %cst_25 : f32 to vector<16x64xf32>
    %33 = arith.maximumf %31, %32 : vector<16x64xf32>
    %34 = arith.mulf %16, %33 : vector<16x64xf32>
    %cst_26 = arith.constant 1.000000e+00 : f32
    %35 = vector.broadcast %cst_26 : f32 to vector<1x64xf32>
    %cst_27 = arith.constant dense<0.000000e+00> : vector<1x16xf32>
    %36 = tpu.matmul %35, %34, %cst_27 {dimension_numbers = #tpu.dot_dimension_numbers<[1], [1], [0], [0], [0, 0, 1, 0], [], []>} : vector<1x64xf32>, vector<16x64xf32>, vector<1x16xf32> -> vector<1x16xf32>
    %37 = vector.shape_cast %36 : vector<1x16xf32> to vector<1x1x16xf32>
    %c0_28 = arith.constant 0 : index
    %c0_29 = arith.constant 0 : index
    %c0_30 = arith.constant 0 : index
    %38 = vector.load %arg12[%c0_28, %c0_29, %c0_30] : memref<1x1x16xf32, #tpu.memory_space<vmem>>, vector<1x1x16xf32>
    tpu.vector_store %arg12[%c0_28, %c0_29, %c0_30], %37 {strides = array<i32>} : memref<1x1x16xf32, #tpu.memory_space<vmem>>, vector<1x1x16xf32>,
    %c0_31 = arith.constant 0 : index
    %c0_32 = arith.constant 0 : index
    %c0_33 = arith.constant 0 : index
    %39 = vector.load %arg11[%c0_31, %c0_32, %c0_33] : memref<1x1x16xf32, #tpu.memory_space<vmem>>, vector<1x1x16xf32>
    %40 = vector.shape_cast %39 : vector<1x1x16xf32> to vector<1x16xf32>
    %cst_34 = arith.constant 0.000000e+00 : f32
    %41 = vector.broadcast %cst_34 : f32 to vector<1x16xf32>
    %42 = arith.maximumf %36, %41 : vector<1x16xf32>
    %43 = arith.mulf %36, %40 : vector<1x16xf32>
    %44 = arith.subf %42, %43 : vector<1x16xf32>
    %45 = math.absf %36 : vector<1x16xf32>
    %cst_35 = arith.constant 0.000000e+00 : f32
    %46 = vector.broadcast %cst_35 : f32 to vector<1x16xf32>
    %47 = arith.subf %46, %45 : vector<1x16xf32>
    %48 = math.exp %47 : vector<1x16xf32>
    %49 = math.log1p %48 : vector<1x16xf32>
    %50 = arith.addf %44, %49 : vector<1x16xf32>
    %c16_i32 = arith.constant 16 : i32
    %51 = arith.muli %arg0, %c16_i32 : i32
    %52 = tpu.iota {dimensions = array<i32: 1>} : vector<1x16xi32>
    %53 = vector.broadcast %51 : i32 to vector<1x16xi32>
    %54 = arith.addi %53, %52 : vector<1x16xi32>
    %c40_i32 = arith.constant 40 : i32
    %55 = vector.broadcast %c40_i32 : i32 to vector<1x16xi32>
    %56 = arith.cmpi slt, %54, %55 : vector<1x16xi32>
    %cst_36 = arith.constant 0.000000e+00 : f32
    %57 = vector.broadcast %cst_36 : f32 to vector<1x16xf32>
    %58 = arith.select %56, %50, %57 : vector<1x16xi1>, vector<1x16xf32>
    %59 = vector.shape_cast %58 : vector<1x16xf32> to vector<1x1x16xf32>
    %c0_37 = arith.constant 0 : index
    %c0_38 = arith.constant 0 : index
    %c0_39 = arith.constant 0 : index
    %60 = vector.load %arg13[%c0_37, %c0_38, %c0_39] : memref<1x1x16xf32, #tpu.memory_space<vmem>>, vector<1x1x16xf32>
    tpu.vector_store %arg13[%c0_37, %c0_38, %c0_39], %59 {strides = array<i32>} : memref<1x1x16xf32, #tpu.memory_space<vmem>>, vector<1x1x16xf32>,
    return
  }
  func.func @transform_0(%arg0: i32) -> (i32, i32) {
    %c0_i32 = arith.constant 0 : i32
    %c0_i32_0 = arith.constant 0 : i32
    return %arg0, %c0_i32 : i32, i32
  }
  func.func @transform_1(%arg0: i32) -> (i32, i32) {
    %c0_i32 = arith.constant 0 : i32
    %c0_i32_0 = arith.constant 0 : i32
    return %arg0, %c0_i32 : i32, i32
  }
  func.func @transform_2(%arg0: i32) -> (i32, i32) {
    %c0_i32 = arith.constant 0 : i32
    %c0_i32_0 = arith.constant 0 : i32
    %c0_i32_1 = arith.constant 0 : i32
    return %c0_i32, %c0_i32_0 : i32, i32
  }
  func.func @transform_3(%arg0: i32) -> (i32, i32) {
    %c0_i32 = arith.constant 0 : i32
    %c0_i32_0 = arith.constant 0 : i32
    %c0_i32_1 = arith.constant 0 : i32
    return %c0_i32, %c0_i32_0 : i32, i32
  }
  func.func @transform_4(%arg0: i32) -> (i32, i32) {
    %c0_i32 = arith.constant 0 : i32
    %c0_i32_0 = arith.constant 0 : i32
    %c0_i32_1 = arith.constant 0 : i32
    return %c0_i32, %c0_i32_0 : i32, i32
  }
  func.func @transform_5(%arg0: i32) -> (i32, i32) {
    %c0_i32 = arith.constant 0 : i32
    %c0_i32_0 = arith.constant 0 : i32
    %c0_i32_1 = arith.constant 0 : i32
    return %c0_i32, %c0_i32_0 : i32, i32
  }
  func.func @transform_6(%arg0: i32) -> (i32, i32) {
    %c0_i32 = arith.constant 0 : i32
    %c0_i32_0 = arith.constant 0 : i32
    %c0_i32_1 = arith.constant 0 : i32
    return %c0_i32, %c0_i32_0 : i32, i32
  }
  func.func @transform_7(%arg0: i32) -> (i32, i32) {
    %c0_i32 = arith.constant 0 : i32
    %c0_i32_0 = arith.constant 0 : i32
    %c0_i32_1 = arith.constant 0 : i32
    return %c0_i32, %c0_i32_0 : i32, i32
  }
  func.func @transform_8(%arg0: i32) -> (i32, i32) {
    %c0_i32 = arith.constant 0 : i32
    %c0_i32_0 = arith.constant 0 : i32
    %c0_i32_1 = arith.constant 0 : i32
    return %c0_i32, %c0_i32_0 : i32, i32
  }
  func.func @transform_9(%arg0: i32) -> (i32, i32) {
    %c0_i32 = arith.constant 0 : i32
    %c0_i32_0 = arith.constant 0 : i32
    %c0_i32_1 = arith.constant 0 : i32
    return %c0_i32, %c0_i32_0 : i32, i32
  }
  func.func @transform_10(%arg0: i32) -> (i32, i32, i32) {
    %c0_i32 = arith.constant 0 : i32
    %c0_i32_0 = arith.constant 0 : i32
    %c0_i32_1 = arith.constant 0 : i32
    return %arg0, %c0_i32, %c0_i32_0 : i32, i32, i32
  }
  func.func @transform_11(%arg0: i32) -> (i32, i32, i32) {
    %c0_i32 = arith.constant 0 : i32
    %c0_i32_0 = arith.constant 0 : i32
    %c0_i32_1 = arith.constant 0 : i32
    return %arg0, %c0_i32, %c0_i32_0 : i32, i32, i32
  }
  func.func @transform_12(%arg0: i32) -> (i32, i32, i32) {
    %c0_i32 = arith.constant 0 : i32
    %c0_i32_0 = arith.constant 0 : i32
    %c0_i32_1 = arith.constant 0 : i32
    return %arg0, %c0_i32, %c0_i32_0 : i32, i32, i32
  }
}

</mosaic_0001>

<llo_original>
// kernel: tpu_custom_call.1
$region0: #{tpu_custom_call.1}
  #allocation0 [shape = 'u32[]', space=smem, size = 0x4, offset = 0x4, fixed_abs, tag = 'smem constant byte address 0x4 - core index']
  #allocation1 [shape = 'u32[144,128]{1,0:T(1,128)}', space=vmem, size = 0x12000, scoped, tag = 'internal scratch']
  %s0 = inlined_call_operand.vmem [shape: f32[48,128], index: 0, kind: input, shape index: {}]
  %s1 = inlined_call_operand.hbm [shape: f32[48,128], index: 1, kind: input, shape index: {}]
  %s2 = inlined_call_operand.vmem [shape: bf16[128,128], index: 2, kind: input, shape index: {}]
  %s3 = inlined_call_operand.vmem [shape: f32[1,128], index: 3, kind: input, shape index: {}]
  %s4 = inlined_call_operand.vmem [shape: bf16[128,64], index: 4, kind: input, shape index: {}]
  %s5 = inlined_call_operand.vmem [shape: f32[1,64], index: 5, kind: input, shape index: {}]
  %s6 = inlined_call_operand.vmem [shape: bf16[128,128], index: 6, kind: input, shape index: {}]
  %s7 = inlined_call_operand.vmem [shape: f32[1,128], index: 7, kind: input, shape index: {}]
  %s8 = inlined_call_operand.vmem [shape: bf16[128,64], index: 8, kind: input, shape index: {}]
  %s9 = inlined_call_operand.vmem [shape: f32[1,64], index: 9, kind: input, shape index: {}]
  %s10 = inlined_call_operand.vmem [shape: f32[3,1,16], index: 10, kind: input, shape index: {}]
  %s11 = inlined_call_operand.hbm [shape: f32[3,1,16], index: 11, kind: output, shape index: {0}]
  %s12 = inlined_call_operand.hbm [shape: f32[3,1,16], index: 12, kind: output, shape index: {1}]
  %13 = xla_tuple %s11, %s12
  %s14 = sld [smem:[#allocation0]]
  $region89: #{tpu_custom_call.1} parent=0
    _
  %s16 = ssub.s32 1, %s14
  %s17 = scalar_select 0, %s16, %s14
  $region1: #{tpu_custom_call.1} parent=0
    #allocation2 [shape = 'u8[16384]{0}', space=vmem, size = 0x4000, scoped, tag = 'input window, operand 1']
    #allocation3 [shape = 's32[2]{0}', space=sflag, size = 0x8, scoped, tag = 'scoped memory for tpu_custom_call.1']
    #allocation4 [shape = 's32[2]{0}', space=sflag, size = 0x8, scoped, tag = 'scoped memory for tpu_custom_call.1']
    #allocation5 [shape = 'u8[1024]{0}', space=vmem, size = 0x400, scoped, tag = 'output window, operand 0']
    #allocation6 [shape = 'u8[1024]{0}', space=vmem, size = 0x400, scoped, tag = 'output window, operand 1']
    #allocation7 [shape = 's32[2]{0}', space=sflag, size = 0x8, scoped, tag = 'scoped memory for tpu_custom_call.1']
    %18 = vsyncpa [#allocation3], 0
    %s19 = scalar_lea.sflag [#allocation3], 1
    %20 = vsyncpa %s19, 0
    %21 = vsyncpa [#allocation4], 0
    %s22 = scalar_lea.sflag [#allocation4], 1
    %23 = vsyncpa %s22, 0
    %24 = vsyncpa [#allocation7], 0
    %s25 = scalar_lea.sflag [#allocation7], 1
    %26 = vsyncpa %s25, 0
    loop: start=0, step=1, limit=5
    $region2: #{tpu_custom_call.1} parent=1 // loop_pre_header
      _
    $region3: #{tpu_custom_call.1} parent=1 // loop_header
      %s28 = sphi 0, %s32
      %p29 = scmp.ge.s32.totalorder %s28, 5
      %s38 = sphi 0, %s40
      %s41 = sphi 0, %s38
      %s42 = sphi 0, %s41
      %s58 = sphi 0, %s42
      %s64 = sphi 0, %s66
      %s67 = sphi 0, %s64
      %s68 = sphi 0, %s67
      %s84 = sphi 0, %s68
      %s88 = sphi 0, %s88
      %s90 = sphi 0, %s88
      %s91 = sphi 0, %s90
      %s105 = sphi 0, %s91
      %s109 = sphi 0, %s109
      %s111 = sphi 0, %s109
      %s112 = sphi 0, %s111
      %s126 = sphi 0, %s112
      %s130 = sphi 0, %s130
      %s132 = sphi 0, %s130
      %s133 = sphi 0, %s132
      %s147 = sphi 0, %s133
      %s151 = sphi 0, %s151
      %s153 = sphi 0, %s151
      %s154 = sphi 0, %s153
      %s168 = sphi 0, %s154
      %s172 = sphi 0, %s172
      %s174 = sphi 0, %s172
      %s175 = sphi 0, %s174
      %s189 = sphi 0, %s175
      %s193 = sphi 0, %s193
      %s195 = sphi 0, %s193
      %s196 = sphi 0, %s195
      %s210 = sphi 0, %s196
      %s214 = sphi 0, %s214
      %s216 = sphi 0, %s214
      %s217 = sphi 0, %s216
      %s231 = sphi 0, %s217
      %s235 = sphi 0, %s235
      %s237 = sphi 0, %s235
      %s238 = sphi 0, %s237
      %s252 = sphi 0, %s238
      %s258 = sphi 0, %s260
      %s261 = sphi 0, %s258
      %s262 = sphi 0, %s261
      %s278 = sphi 0, %s262
      %s284 = sphi 0, %s286
      %s287 = sphi 0, %s284
      %s288 = sphi 0, %s287
      %s304 = sphi 0, %s288
      %s310 = sphi 0, %s312
      %s313 = sphi 0, %s310
      %s314 = sphi 0, %s313
      %s330 = sphi 0, %s314
    $region4: #{tpu_custom_call.1} parent=1 // loop_header_branch
      %31 = sbr.rel (%p29) target = $region8
    $region5: #{tpu_custom_call.1} parent=1 // loop_body
      %s33 = ssub.s32 %s28, 1
      %s34 = ssub.s32 %s28, 2
      %s35 = sadd.s32 %s28, 1
      %s36 = ssub.s32 %s28, %s35
      %p37 = scmp.eq.s32.totalorder %s36, 0
      %s39 = sadd.s32 %s38, 1
      %s40 = scalar_select %p37, %s38, %s39
      %p43 = pneg %p37
      %p44 = scmp.eq.s32.totalorder %s28, 2
      %p45 = por %p43, %p44
      %p46 = scmp.ne.s32.totalorder %s38, %s41
      %p47 = scmp.eq.s32.totalorder %s28, 0
      %p48 = por %p46, %p47
      %p49 = scmp.ne.s32.totalorder %s38, %s41
      %p50 = scmp.eq.s32.totalorder %s33, 2
      %p51 = por %p49, %p50
      %p52 = scmp.ne.s32.totalorder %s41, %s42
      %p53 = scmp.eq.s32.totalorder %s33, 0
      %p54 = por %p52, %p53
      %p55 = scmp.ne.s32.totalorder %s41, %s42
      %p56 = scmp.eq.s32.totalorder %s34, 2
      %p57 = por %p55, %p56
      %p59 = scmp.ne.s32.totalorder %s42, %s58
      %p60 = scmp.eq.s32.totalorder %s34, 0
      %p61 = por %p59, %p60
      %s62 = ssub.s32 %s28, %s35
      %p63 = scmp.eq.s32.totalorder %s62, 0
      %s65 = sadd.s32 %s64, 1
      %s66 = scalar_select %p63, %s64, %s65
      %p69 = pneg %p63
      %p70 = scmp.eq.s32.totalorder %s28, 2
      %p71 = por %p69, %p70
      %p72 = scmp.ne.s32.totalorder %s64, %s67
      %p73 = scmp.eq.s32.totalorder %s28, 0
      %p74 = por %p72, %p73
      %p75 = scmp.ne.s32.totalorder %s64, %s67
      %p76 = scmp.eq.s32.totalorder %s33, 2
      %p77 = por %p75, %p76
      %p78 = scmp.ne.s32.totalorder %s67, %s68
      %p79 = scmp.eq.s32.totalorder %s33, 0
      %p80 = por %p78, %p79
      %p81 = scmp.ne.s32.totalorder %s67, %s68
      %p82 = scmp.eq.s32.totalorder %s34, 2
      %p83 = por %p81, %p82
      %p85 = scmp.ne.s32.totalorder %s68, %s84
      %p86 = scmp.eq.s32.totalorder %s34, 0
      %p87 = por %p85, %p86
      %s89 = sadd.s32 %s88, 1
      %p92 = scmp.eq.s32.totalorder %s28, 2
      %p93 = scmp.ne.s32.totalorder %s88, %s90
      %p94 = scmp.eq.s32.totalorder %s28, 0
      %p95 = por %p93, %p94
      %p96 = scmp.ne.s32.totalorder %s88, %s90
      %p97 = scmp.eq.s32.totalorder %s33, 2
      %p98 = por %p96, %p97
      %p99 = scmp.ne.s32.totalorder %s90, %s91
      %p100 = scmp.eq.s32.totalorder %s33, 0
      %p101 = por %p99, %p100
      %p102 = scmp.ne.s32.totalorder %s90, %s91
      %p103 = scmp.eq.s32.totalorder %s34, 2
      %p104 = por %p102, %p103
      %p106 = scmp.ne.s32.totalorder %s91, %s105
      %p107 = scmp.eq.s32.totalorder %s34, 0
      %p108 = por %p106, %p107
      %s110 = sadd.s32 %s109, 1
      %p113 = scmp.eq.s32.totalorder %s28, 2
      %p114 = scmp.ne.s32.totalorder %s109, %s111
      %p115 = scmp.eq.s32.totalorder %s28, 0
      %p116 = por %p114, %p115
      %p117 = scmp.ne.s32.totalorder %s109, %s111
      %p118 = scmp.eq.s32.totalorder %s33, 2
      %p119 = por %p117, %p118
      %p120 = scmp.ne.s32.totalorder %s111, %s112
      %p121 = scmp.eq.s32.totalorder %s33, 0
      %p122 = por %p120, %p121
      %p123 = scmp.ne.s32.totalorder %s111, %s112
      %p124 = scmp.eq.s32.totalorder %s34, 2
      %p125 = por %p123, %p124
      %p127 = scmp.ne.s32.totalorder %s112, %s126
      %p128 = scmp.eq.s32.totalorder %s34, 0
      %p129 = por %p127, %p128
      %s131 = sadd.s32 %s130, 1
      %p134 = scmp.eq.s32.totalorder %s28, 2
      %p135 = scmp.ne.s32.totalorder %s130, %s132
      %p136 = scmp.eq.s32.totalorder %s28, 0
      %p137 = por %p135, %p136
      %p138 = scmp.ne.s32.totalorder %s130, %s132
      %p139 = scmp.eq.s32.totalorder %s33, 2
      %p140 = por %p138, %p139
      %p141 = scmp.ne.s32.totalorder %s132, %s133
      %p142 = scmp.eq.s32.totalorder %s33, 0
      %p143 = por %p141, %p142
      %p144 = scmp.ne.s32.totalorder %s132, %s133
      %p145 = scmp.eq.s32.totalorder %s34, 2
      %p146 = por %p144, %p145
      %p148 = scmp.ne.s32.totalorder %s133, %s147
      %p149 = scmp.eq.s32.totalorder %s34, 0
      %p150 = por %p148, %p149
      %s152 = sadd.s32 %s151, 1
      %p155 = scmp.eq.s32.totalorder %s28, 2
      %p156 = scmp.ne.s32.totalorder %s151, %s153
      %p157 = scmp.eq.s32.totalorder %s28, 0
      %p158 = por %p156, %p157
      %p159 = scmp.ne.s32.totalorder %s151, %s153
      %p160 = scmp.eq.s32.totalorder %s33, 2
      %p161 = por %p159, %p160
      %p162 = scmp.ne.s32.totalorder %s153, %s154
      %p163 = scmp.eq.s32.totalorder %s33, 0
      %p164 = por %p162, %p163
      %p165 = scmp.ne.s32.totalorder %s153, %s154
      %p166 = scmp.eq.s32.totalorder %s34, 2
      %p167 = por %p165, %p166
      %p169 = scmp.ne.s32.totalorder %s154, %s168
      %p170 = scmp.eq.s32.totalorder %s34, 0
      %p171 = por %p169, %p170
      %s173 = sadd.s32 %s172, 1
      %p176 = scmp.eq.s32.totalorder %s28, 2
      %p177 = scmp.ne.s32.totalorder %s172, %s174
      %p178 = scmp.eq.s32.totalorder %s28, 0
      %p179 = por %p177, %p178
      %p180 = scmp.ne.s32.totalorder %s172, %s174
      %p181 = scmp.eq.s32.totalorder %s33, 2
      %p182 = por %p180, %p181
      %p183 = scmp.ne.s32.totalorder %s174, %s175
      %p184 = scmp.eq.s32.totalorder %s33, 0
      %p185 = por %p183, %p184
      %p186 = scmp.ne.s32.totalorder %s174, %s175
      %p187 = scmp.eq.s32.totalorder %s34, 2
      %p188 = por %p186, %p187
      %p190 = scmp.ne.s32.totalorder %s175, %s189
      %p191 = scmp.eq.s32.totalorder %s34, 0
      %p192 = por %p190, %p191
      %s194 = sadd.s32 %s193, 1
      %p197 = scmp.eq.s32.totalorder %s28, 2
      %p198 = scmp.ne.s32.totalorder %s193, %s195
      %p199 = scmp.eq.s32.totalorder %s28, 0
      %p200 = por %p198, %p199
      %p201 = scmp.ne.s32.totalorder %s193, %s195
      %p202 = scmp.eq.s32.totalorder %s33, 2
      %p203 = por %p201, %p202
      %p204 = scmp.ne.s32.totalorder %s195, %s196
      %p205 = scmp.eq.s32.totalorder %s33, 0
      %p206 = por %p204, %p205
      %p207 = scmp.ne.s32.totalorder %s195, %s196
      %p208 = scmp.eq.s32.totalorder %s34, 2
      %p209 = por %p207, %p208
      %p211 = scmp.ne.s32.totalorder %s196, %s210
      %p212 = scmp.eq.s32.totalorder %s34, 0
      %p213 = por %p211, %p212
      %s215 = sadd.s32 %s214, 1
      %p218 = scmp.eq.s32.totalorder %s28, 2
      %p219 = scmp.ne.s32.totalorder %s214, %s216
      %p220 = scmp.eq.s32.totalorder %s28, 0
      %p221 = por %p219, %p220
      %p222 = scmp.ne.s32.totalorder %s214, %s216
      %p223 = scmp.eq.s32.totalorder %s33, 2
      %p224 = por %p222, %p223
      %p225 = scmp.ne.s32.totalorder %s216, %s217
      %p226 = scmp.eq.s32.totalorder %s33, 0
      %p227 = por %p225, %p226
      %p228 = scmp.ne.s32.totalorder %s216, %s217
      %p229 = scmp.eq.s32.totalorder %s34, 2
      %p230 = por %p228, %p229
      %p232 = scmp.ne.s32.totalorder %s217, %s231
      %p233 = scmp.eq.s32.totalorder %s34, 0
      %p234 = por %p232, %p233
      %s236 = sadd.s32 %s235, 1
      %p239 = scmp.eq.s32.totalorder %s28, 2
      %p240 = scmp.ne.s32.totalorder %s235, %s237
      %p241 = scmp.eq.s32.totalorder %s28, 0
      %p242 = por %p240, %p241
      %p243 = scmp.ne.s32.totalorder %s235, %s237
      %p244 = scmp.eq.s32.totalorder %s33, 2
      %p245 = por %p243, %p244
      %p246 = scmp.ne.s32.totalorder %s237, %s238
      %p247 = scmp.eq.s32.totalorder %s33, 0
      %p248 = por %p246, %p247
      %p249 = scmp.ne.s32.totalorder %s237, %s238
      %p250 = scmp.eq.s32.totalorder %s34, 2
      %p251 = por %p249, %p250
      %p253 = scmp.ne.s32.totalorder %s238, %s252
      %p254 = scmp.eq.s32.totalorder %s34, 0
      %p255 = por %p253, %p254
      %s256 = ssub.s32 %s28, %s35
      %p257 = scmp.eq.s32.totalorder %s256, 0
      %s259 = sadd.s32 %s258, 1
      %s260 = scalar_select %p257, %s258, %s259
      %p263 = pneg %p257
      %p264 = scmp.eq.s32.totalorder %s28, 2
      %p265 = por %p263, %p264
      %p266 = scmp.ne.s32.totalorder %s258, %s261
      %p267 = scmp.eq.s32.totalorder %s28, 0
      %p268 = por %p266, %p267
      %p269 = scmp.ne.s32.totalorder %s258, %s261
      %p270 = scmp.eq.s32.totalorder %s33, 2
      %p271 = por %p269, %p270
      %p272 = scmp.ne.s32.totalorder %s261, %s262
      %p273 = scmp.eq.s32.totalorder %s33, 0
      %p274 = por %p272, %p273
      %p275 = scmp.ne.s32.totalorder %s261, %s262
      %p276 = scmp.eq.s32.totalorder %s34, 2
      %p277 = por %p275, %p276
      %p279 = scmp.ne.s32.totalorder %s262, %s278
      %p280 = scmp.eq.s32.totalorder %s34, 0
      %p281 = por %p279, %p280
      %s282 = ssub.s32 %s28, %s35
      %p283 = scmp.eq.s32.totalorder %s282, 0
      %s285 = sadd.s32 %s284, 1
      %s286 = scalar_select %p283, %s284, %s285
      %p289 = pneg %p283
      %p290 = scmp.eq.s32.totalorder %s28, 2
      %p291 = por %p289, %p290
      %p292 = scmp.ne.s32.totalorder %s284, %s287
      %p293 = scmp.eq.s32.totalorder %s28, 0
      %p294 = por %p292, %p293
      %p295 = scmp.ne.s32.totalorder %s284, %s287
      %p296 = scmp.eq.s32.totalorder %s33, 2
      %p297 = por %p295, %p296
      %p298 = scmp.ne.s32.totalorder %s287, %s288
      %p299 = scmp.eq.s32.totalorder %s33, 0
      %p300 = por %p298, %p299
      %p301 = scmp.ne.s32.totalorder %s287, %s288
      %p302 = scmp.eq.s32.totalorder %s34, 2
      %p303 = por %p301, %p302
      %p305 = scmp.ne.s32.totalorder %s288, %s304
      %p306 = scmp.eq.s32.totalorder %s34, 0
      %p307 = por %p305, %p306
      %s308 = ssub.s32 %s28, %s35
      %p309 = scmp.eq.s32.totalorder %s308, 0
      %s311 = sadd.s32 %s310, 1
      %s312 = scalar_select %p309, %s310, %s311
      %p315 = pneg %p309
      %p316 = scmp.eq.s32.totalorder %s28, 2
      %p317 = por %p315, %p316
      %p318 = scmp.ne.s32.totalorder %s310, %s313
      %p319 = scmp.eq.s32.totalorder %s28, 0
      %p320 = por %p318, %p319
      %p321 = scmp.ne.s32.totalorder %s310, %s313
      %p322 = scmp.eq.s32.totalorder %s33, 2
      %p323 = por %p321, %p322
      %p324 = scmp.ne.s32.totalorder %s313, %s314
      %p325 = scmp.eq.s32.totalorder %s33, 0
      %p326 = por %p324, %p325
      %p327 = scmp.ne.s32.totalorder %s313, %s314
      %p328 = scmp.eq.s32.totalorder %s34, 2
      %p329 = por %p327, %p328
      %p331 = scmp.ne.s32.totalorder %s314, %s330
      %p332 = scmp.eq.s32.totalorder %s34, 0
      %p333 = por %p331, %p332
      %p334 = scmp.le.s32.totalorder 1, %s28
      %p335 = scmp.lt.s32.totalorder %s28, 4
      %p336 = pnand %p334, %p335
      %p337 = pneg %p336
      // Predicated region
      $region9: #{tpu_custom_call.1} parent=5 // pred_check
        _
      $region10: #{tpu_custom_call.1} parent=5 // pred_check_branch
        %339 = sbr.rel (%p336) target = $region12
      $region11: #{tpu_custom_call.1} parent=5 // pred_region
        %s340 = ssub.s32 %s28, 1
        // Predicated region
        $region13: #{tpu_custom_call.1} parent=11 // pred_check
          %p341 = pneg %p101
        $region14: #{tpu_custom_call.1} parent=11 // pred_check_branch
          %343 = sbr.rel (%p341) target = $region16
        $region15: #{tpu_custom_call.1} parent=11 // pred_region
          _
        $region16: #{tpu_custom_call.1} parent=11 // pred_fallthru
          _
        // Predicated region
        $region17: #{tpu_custom_call.1} parent=11 // pred_check
          %p344 = pneg %p122
        $region18: #{tpu_custom_call.1} parent=11 // pred_check_branch
          %346 = sbr.rel (%p344) target = $region20
        $region19: #{tpu_custom_call.1} parent=11 // pred_region
          _
        $region20: #{tpu_custom_call.1} parent=11 // pred_fallthru
          _
        // Predicated region
        $region21: #{tpu_custom_call.1} parent=11 // pred_check
          %p347 = pneg %p143
        $region22: #{tpu_custom_call.1} parent=11 // pred_check_branch
          %349 = sbr.rel (%p347) target = $region24
        $region23: #{tpu_custom_call.1} parent=11 // pred_region
          _
        $region24: #{tpu_custom_call.1} parent=11 // pred_fallthru
          _
        // Predicated region
        $region25: #{tpu_custom_call.1} parent=11 // pred_check
          %p350 = pneg %p164
        $region26: #{tpu_custom_call.1} parent=11 // pred_check_branch
          %352 = sbr.rel (%p350) target = $region28
        $region27: #{tpu_custom_call.1} parent=11 // pred_region
          _
        $region28: #{tpu_custom_call.1} parent=11 // pred_fallthru
          _
        // Predicated region
        $region29: #{tpu_custom_call.1} parent=11 // pred_check
          %p353 = pneg %p185
        $region30: #{tpu_custom_call.1} parent=11 // pred_check_branch
          %355 = sbr.rel (%p353) target = $region32
        $region31: #{tpu_custom_call.1} parent=11 // pred_region
          _
        $region32: #{tpu_custom_call.1} parent=11 // pred_fallthru
          _
        // Predicated region
        $region33: #{tpu_custom_call.1} parent=11 // pred_check
          %p356 = pneg %p206
        $region34: #{tpu_custom_call.1} parent=11 // pred_check_branch
          %358 = sbr.rel (%p356) target = $region36
        $region35: #{tpu_custom_call.1} parent=11 // pred_region
          _
        $region36: #{tpu_custom_call.1} parent=11 // pred_fallthru
          _
        // Predicated region
        $region37: #{tpu_custom_call.1} parent=11 // pred_check
          %p359 = pneg %p227
        $region38: #{tpu_custom_call.1} parent=11 // pred_check_branch
          %361 = sbr.rel (%p359) target = $region40
        $region39: #{tpu_custom_call.1} parent=11 // pred_region
          _
        $region40: #{tpu_custom_call.1} parent=11 // pred_fallthru
          _
        // Predicated region
        $region41: #{tpu_custom_call.1} parent=11 // pred_check
          %p362 = pneg %p248
        $region42: #{tpu_custom_call.1} parent=11 // pred_check_branch
          %364 = sbr.rel (%p362) target = $region44
        $region43: #{tpu_custom_call.1} parent=11 // pred_region
          _
        $region44: #{tpu_custom_call.1} parent=11 // pred_fallthru
          _
      $region12: #{tpu_custom_call.1} parent=5 // pred_fallthru
        _
      %p365 = scmp.lt.s32.totalorder %s28, 3
      // Predicated region
      $region45: #{tpu_custom_call.1} parent=5 // pred_check
        %p366 = pneg %p365
      $region46: #{tpu_custom_call.1} parent=5 // pred_check_branch
        %368 = sbr.rel (%p366) target = $region48
      $region47: #{tpu_custom_call.1} parent=5 // pred_region
        // Predicated region
        $region49: #{tpu_custom_call.1} parent=47 // pred_check
          %p369 = pneg %p48
        $region50: #{tpu_custom_call.1} parent=47 // pred_check_branch
          %371 = sbr.rel (%p369) target = $region52
        $region51: #{tpu_custom_call.1} parent=47 // pred_region
          %s372 = smul.u32 2, %s28
          %p373 = scmp.lt.s32.totalorder %s372, 5
          %s374 = scalar_select %p373, %s372, 5
          %s375 = smul.addr %s374, 8
          %s376 = scalar_lea.vmem %s0, %s375
          %s377 = smul.u32 2, %s28
        $region52: #{tpu_custom_call.1} parent=47 // pred_fallthru
          _
        // Predicated region
        $region53: #{tpu_custom_call.1} parent=47 // pred_check
          %p378 = pneg %p74
        $region54: #{tpu_custom_call.1} parent=47 // pred_check_branch
          %380 = sbr.rel (%p378) target = $region56
        $region55: #{tpu_custom_call.1} parent=47 // pred_region
          %s381 = sand.u32 %s64, 1
          %s382 = scalar_lea.sflag [#allocation3], %s381
          %s383 = sand.u32 %s64, 1
          %s384 = smul.addr %s383, 16
          %s385 = scalar_lea.vmem [#allocation2], %s384
          %s386 = smul.u32 2, %s28
          %s388 = ssub.s32 256, 256
          %389 = vsyncadd %s382, %s388
          %s390 = smul.addr %s386, 128
          %s391 = scalar_lea.hbm %s1, %s390
          %s392 = sshll.u32 %s385, 4
          %s393 = int_to_ptr.vmem [resolvable:$true] %s392
          %398 = dma.hbm_to_vmem [thread:$0]  %s391, 256, %s393, %s382, 128, 128, 8
        $region56: #{tpu_custom_call.1} parent=47 // pred_fallthru
          _
        // Predicated region
        $region57: #{tpu_custom_call.1} parent=47 // pred_check
          %p399 = pneg %p268
        $region58: #{tpu_custom_call.1} parent=47 // pred_check_branch
          %401 = sbr.rel (%p399) target = $region60
        $region59: #{tpu_custom_call.1} parent=47 // pred_region
          %p402 = scmp.lt.s32.totalorder %s28, 2
          %s403 = scalar_select %p402, %s28, 2
          %s404 = scalar_lea.vmem %s10, %s403
        $region60: #{tpu_custom_call.1} parent=47 // pred_fallthru
          _
      $region48: #{tpu_custom_call.1} parent=5 // pred_fallthru
        _
      %p405 = scmp.le.s32.totalorder 1, %s28
      %p406 = scmp.lt.s32.totalorder %s28, 4
      %p407 = pnand %p405, %p406
      %p408 = pneg %p407
      // Predicated region
      $region61: #{tpu_custom_call.1} parent=5 // pred_check
        _
      $region62: #{tpu_custom_call.1} parent=5 // pred_check_branch
        %410 = sbr.rel (%p407) target = $region64
      $region63: #{tpu_custom_call.1} parent=5 // pred_region
        %s411 = ssub.s32 %s28, 1
        %s412 = sand.u32 %s67, 1
        %s413 = scalar_lea.sflag [#allocation3], %s412
        %s414 = sand.u32 %s67, 1
        %s415 = smul.addr %s414, 16
        %s416 = scalar_lea.vmem [#allocation2], %s415
        // Predicated region
        $region65: #{tpu_custom_call.1} parent=63 // pred_check
          %p417 = pneg %p80
        $region66: #{tpu_custom_call.1} parent=63 // pred_check_branch
          %419 = sbr.rel (%p417) target = $region68
        $region67: #{tpu_custom_call.1} parent=63 // pred_region
          %420 = dma.done %s413, 256
        $region68: #{tpu_custom_call.1} parent=63 // pred_fallthru
          _
        %s421 = smul.u32 2, %s33
        %p422 = scmp.lt.s32.totalorder %s421, 5
        %s423 = scalar_select %p422, %s421, 5
        %s424 = smul.addr %s423, 8
        %s425 = scalar_lea.vmem %s0, %s424
        %p426 = pneg %p54
        %p427 = pneg %p51
        %s428 = sand.u32 %s67, 1
        %s429 = scalar_lea.sflag [#allocation3], %s428
        %s430 = sand.u32 %s67, 1
        %s431 = smul.addr %s430, 16
        %s432 = scalar_lea.vmem [#allocation2], %s431
        %p433 = pneg %p80
        %p434 = pneg %p77
        %p435 = pneg %p101
        %p436 = pneg %p98
        %p437 = pneg %p122
        %p438 = pneg %p119
        %p439 = pneg %p143
        %p440 = pneg %p140
        %p441 = pneg %p164
        %p442 = pneg %p161
        %p443 = pneg %p185
        %p444 = pneg %p182
        %p445 = pneg %p206
        %p446 = pneg %p203
        %p447 = pneg %p227
        %p448 = pneg %p224
        %p449 = pneg %p248
        %p450 = pneg %p245
        %p451 = scmp.lt.s32.totalorder %s33, 2
        %s452 = scalar_select %p451, %s33, 2
        %s453 = scalar_lea.vmem %s10, %s452
        %p454 = pneg %p274
        %p455 = pneg %p271
        %p456 = pneg %p300
        %p457 = pneg %p297
        %s458 = sand.u32 %s287, 1
        %s459 = scalar_lea.sflag [#allocation4], %s458
        %s460 = sand.u32 %s287, 1
        %s461 = scalar_lea.vmem [#allocation5], %s460
        %p462 = pneg %p326
        %p463 = pneg %p323
        %s464 = sand.u32 %s313, 1
        %s465 = scalar_lea.sflag [#allocation7], %s464
        %s466 = sand.u32 %s313, 1
        %s467 = scalar_lea.vmem [#allocation6], %s466
        %s468 = smul.u32 2, %s33
        %p469 = scmp.lt.s32.totalorder %s468, 5
        %s470 = scalar_select %p469, %s468, 5
        %s471 = smul.addr %s470, 8
        %s472 = scalar_lea.vmem %s0, %s471
        %s473 = smul.u32 2, %s33
        %s474 = smul.u32 2, %s33
        %p475 = scmp.lt.s32.totalorder %s33, 2
        %s476 = scalar_select %p475, %s33, 2
        %s477 = scalar_lea.vmem %s10, %s476
        %v479 = vld [vmem:[%s472] sm:$0xff]
        %v480 = vld [vmem:[%s472 + $0x8] sm:$0xff]
        %v481 = vld [vmem:[%s2] sm:$0xf]
        %v482 = vld [vmem:[%s2 + $0x4] sm:$0xf]
        %v483 = vld [vmem:[%s2 + $0x8] sm:$0xf]
        %v484 = vld [vmem:[%s2 + $0xc] sm:$0xf]
        %v485 = vld [vmem:[%s2 + $0x10] sm:$0xf]
        %v486 = vld [vmem:[%s2 + $0x14] sm:$0xf]
        %v487 = vld [vmem:[%s2 + $0x18] sm:$0xf]
        %v488 = vld [vmem:[%s2 + $0x1c] sm:$0xf]
        %v489 = vld [vmem:[%s2 + $0x20] sm:$0xf]
        %v490 = vld [vmem:[%s2 + $0x24] sm:$0xf]
        %v491 = vld [vmem:[%s2 + $0x28] sm:$0xf]
        %v492 = vld [vmem:[%s2 + $0x2c] sm:$0xf]
        %v493 = vld [vmem:[%s2 + $0x30] sm:$0xf]
        %v494 = vld [vmem:[%s2 + $0x34] sm:$0xf]
        %v495 = vld [vmem:[%s2 + $0x38] sm:$0xf]
        %v496 = vld [vmem:[%s2 + $0x3c] sm:$0xf]
        %v497 = vld [vmem:[%s3] sm:$0x1]
        %v498 = vld [vmem:[%s4] sm:$0xf]
        %v499 = vld [vmem:[%s4 + $0x4] sm:$0xf]
        %v500 = vld [vmem:[%s4 + $0x8] sm:$0xf]
        %v501 = vld [vmem:[%s4 + $0xc] sm:$0xf]
        %v502 = vld [vmem:[%s4 + $0x10] sm:$0xf]
        %v503 = vld [vmem:[%s4 + $0x14] sm:$0xf]
        %v504 = vld [vmem:[%s4 + $0x18] sm:$0xf]
        %v505 = vld [vmem:[%s4 + $0x1c] sm:$0xf]
        %v506 = vld [vmem:[%s4 + $0x20] sm:$0xf]
        %v507 = vld [vmem:[%s4 + $0x24] sm:$0xf]
        %v508 = vld [vmem:[%s4 + $0x28] sm:$0xf]
        %v509 = vld [vmem:[%s4 + $0x2c] sm:$0xf]
        %v510 = vld [vmem:[%s4 + $0x30] sm:$0xf]
        %v511 = vld [vmem:[%s4 + $0x34] sm:$0xf]
        %v512 = vld [vmem:[%s4 + $0x38] sm:$0xf]
        %v513 = vld [vmem:[%s4 + $0x3c] sm:$0xf]
        %v514 = vld [vmem:[%s5] sm:$0x1]
        %v515 = vpack.c.bf16 %v480, %v479
        %v517 = vlaneseq
        %v518 = vshrl.u32 %v517, 7
        %v519 = vsub.s32 0, %v518
        %v520 = vrot.slane %v497, %v519
        %v538 = vunpack.c.l.b16 %v481
        %v539 = vunpack.c.l.b16 %v482
        %v540 = vunpack.c.l.b16 %v483
        %v541 = vunpack.c.l.b16 %v484
        %v542 = vunpack.c.l.b16 %v485
        %v543 = vunpack.c.l.b16 %v486
        %v544 = vunpack.c.l.b16 %v487
        %v545 = vunpack.c.l.b16 %v488
        %v546 = vunpack.c.l.b16 %v489
        %v547 = vunpack.c.l.b16 %v490
        %v548 = vunpack.c.l.b16 %v491
        %v549 = vunpack.c.l.b16 %v492
        %v550 = vunpack.c.l.b16 %v493
        %v551 = vunpack.c.l.b16 %v494
        %v552 = vunpack.c.l.b16 %v495
        %v553 = vunpack.c.l.b16 %v496
        %v554 = vpack.c.b16 %v539, %v538
        %v555 = vpack.c.b16 %v541, %v540
        %v556 = vpack.c.b16 %v543, %v542
        %v557 = vpack.c.b16 %v545, %v544
        %v558 = vpack.c.b16 %v547, %v546
        %v559 = vpack.c.b16 %v549, %v548
        %v560 = vpack.c.b16 %v551, %v550
        %v561 = vpack.c.b16 %v553, %v552
        %570 = vmatprep.subr.bf16.mxu0 0
        %571 = vmatpush1.bf16.msra.mxu0 %v554
        %572 = vmatprep.subr.bf16.mxu0 0
        %573 = vmatpush1.bf16.msra.mxu0 %v555
        %574 = vmatprep.subr.bf16.mxu0 0
        %575 = vmatpush1.bf16.msra.mxu0 %v556
        %576 = vmatprep.subr.bf16.mxu0 0
        %577 = vmatpush1.bf16.msra.mxu0 %v557
        %578 = vmatprep.subr.bf16.mxu0 0
        %579 = vmatpush1.bf16.msra.mxu0 %v558
        %580 = vmatprep.subr.bf16.mxu0 0
        %581 = vmatpush1.bf16.msra.mxu0 %v559
        %582 = vmatprep.subr.bf16.mxu0 0
        %583 = vmatpush1.bf16.msra.mxu0 %v560
        %584 = vmatprep.subr.bf16.mxu0 0
        %585 = vmatpush1.bf16.msra.mxu0 %v561
        %586 = vmatprep.subr.bf16.mxu0 0
        %587 = vmatpush1.bf16.msra.mxu0 0
        %588 = vmatprep.subr.bf16.mxu0 0
        %589 = vmatpush1.bf16.msra.mxu0 0
        %590 = vmatprep.subr.bf16.mxu0 0
        %591 = vmatpush1.bf16.msra.mxu0 0
        %592 = vmatprep.subr.bf16.mxu0 0
        %593 = vmatpush1.bf16.msra.mxu0 0
        %594 = vmatprep.subr.bf16.mxu0 0
        %595 = vmatpush1.bf16.msra.mxu0 0
        %596 = vmatprep.subr.bf16.mxu0 0
        %597 = vmatpush1.bf16.msra.mxu0 0
        %598 = vmatprep.subr.bf16.mxu0 0
        %599 = vmatpush1.bf16.msra.mxu0 0
        %600 = vmatprep.subr.bf16.mxu0 0
        %601 = vmatpush1.bf16.msra.mxu0 0
        %602 = vmatprep.mubr.bf16.mxu0 0
        %603 = vmatmul.mubr.bf16.gmra.mrb[0].mxu0 %v515
        %v604 = vpop.f32.mrb[0].mxu0
        %v605 = vadd.f32 %v520, %v604
        %v606 = vpop.f32.mrb[0].mxu0
        %v607 = vpop.f32.mrb[0].mxu0
        %v608 = vadd.f32 %v520, %v607
        %v609 = vpop.f32.mrb[0].mxu0
        %610 = vdwg.mxu0
        %v611 = vmax.f32 %v605, 0.0
        %v612 = vmax.f32 %v608, 0.0
        %v613 = vpack.c.bf16 %v612, %v611
        %v615 = vlaneseq
        %v616 = vshrl.u32 %v615, 7
        %v617 = vsub.s32 0, %v616
        %v618 = vrot.slane %v514, %v617
        %v636 = vunpack.c.l.b16 %v498
        %v637 = vunpack.c.l.b16 %v499
        %v638 = vunpack.c.l.b16 %v500
        %v639 = vunpack.c.l.b16 %v501
        %v640 = vunpack.c.l.b16 %v502
        %v641 = vunpack.c.l.b16 %v503
        %v642 = vunpack.c.l.b16 %v504
        %v643 = vunpack.c.l.b16 %v505
        %v644 = vunpack.c.l.b16 %v506
        %v645 = vunpack.c.l.b16 %v507
        %v646 = vunpack.c.l.b16 %v508
        %v647 = vunpack.c.l.b16 %v509
        %v648 = vunpack.c.l.b16 %v510
        %v649 = vunpack.c.l.b16 %v511
        %v650 = vunpack.c.l.b16 %v512
        %v651 = vunpack.c.l.b16 %v513
        %v652 = vpack.c.b16 %v637, %v636
        %v653 = vpack.c.b16 %v639, %v638
        %v654 = vpack.c.b16 %v641, %v640
        %v655 = vpack.c.b16 %v643, %v642
        %v656 = vpack.c.b16 %v645, %v644
        %v657 = vpack.c.b16 %v647, %v646
        %v658 = vpack.c.b16 %v649, %v648
        %v659 = vpack.c.b16 %v651, %v650
        %668 = vmatprep.subr.bf16.mxu0 0
        %669 = vmatpush1.bf16.msra.mxu0 %v652
        %670 = vmatprep.subr.bf16.mxu0 0
        %671 = vmatpush1.bf16.msra.mxu0 %v653
        %672 = vmatprep.subr.bf16.mxu0 0
        %673 = vmatpush1.bf16.msra.mxu0 %v654
        %674 = vmatprep.subr.bf16.mxu0 0
        %675 = vmatpush1.bf16.msra.mxu0 %v655
        %676 = vmatprep.subr.bf16.mxu0 0
        %677 = vmatpush1.bf16.msra.mxu0 %v656
        %678 = vmatprep.subr.bf16.mxu0 0
        %679 = vmatpush1.bf16.msra.mxu0 %v657
        %680 = vmatprep.subr.bf16.mxu0 0
        %681 = vmatpush1.bf16.msra.mxu0 %v658
        %682 = vmatprep.subr.bf16.mxu0 0
        %683 = vmatpush1.bf16.msra.mxu0 %v659
        %684 = vmatprep.subr.bf16.mxu0 0
        %685 = vmatpush1.bf16.msra.mxu0 0
        %686 = vmatprep.subr.bf16.mxu0 0
        %687 = vmatpush1.bf16.msra.mxu0 0
        %688 = vmatprep.subr.bf16.mxu0 0
        %689 = vmatpush1.bf16.msra.mxu0 0
        %690 = vmatprep.subr.bf16.mxu0 0
        %691 = vmatpush1.bf16.msra.mxu0 0
        %692 = vmatprep.subr.bf16.mxu0 0
        %693 = vmatpush1.bf16.msra.mxu0 0
        %694 = vmatprep.subr.bf16.mxu0 0
        %695 = vmatpush1.bf16.msra.mxu0 0
        %696 = vmatprep.subr.bf16.mxu0 0
        %697 = vmatpush1.bf16.msra.mxu0 0
        %698 = vmatprep.subr.bf16.mxu0 0
        %699 = vmatpush1.bf16.msra.mxu0 0
        %700 = vmatprep.mubr.bf16.mxu0 0
        %701 = vmatmul.mubr.bf16.gmra.mrb[0].mxu0 %v613
        %v702 = vpop.f32.mrb[0].mxu0
        %v703 = vadd.f32 %v618, %v702
        %v704 = vpop.f32.mrb[0].mxu0
        %v705 = vpop.f32.mrb[0].mxu0
        %v706 = vadd.f32 %v618, %v705
        %v707 = vpop.f32.mrb[0].mxu0
        %708 = vdwg.mxu0
        %v709 = vmax.f32 %v703, 0.0
        %v710 = vmax.f32 %v706, 0.0
        %v711 = vld [vmem:[%s416] sm:$0xff]
        %v712 = vld [vmem:[%s416 + $0x8] sm:$0xff]
        %v713 = vld [vmem:[%s6] sm:$0xf]
        %v714 = vld [vmem:[%s6 + $0x4] sm:$0xf]
        %v715 = vld [vmem:[%s6 + $0x8] sm:$0xf]
        %v716 = vld [vmem:[%s6 + $0xc] sm:$0xf]
        %v717 = vld [vmem:[%s6 + $0x10] sm:$0xf]
        %v718 = vld [vmem:[%s6 + $0x14] sm:$0xf]
        %v719 = vld [vmem:[%s6 + $0x18] sm:$0xf]
        %v720 = vld [vmem:[%s6 + $0x1c] sm:$0xf]
        %v721 = vld [vmem:[%s6 + $0x20] sm:$0xf]
        %v722 = vld [vmem:[%s6 + $0x24] sm:$0xf]
        %v723 = vld [vmem:[%s6 + $0x28] sm:$0xf]
        %v724 = vld [vmem:[%s6 + $0x2c] sm:$0xf]
        %v725 = vld [vmem:[%s6 + $0x30] sm:$0xf]
        %v726 = vld [vmem:[%s6 + $0x34] sm:$0xf]
        %v727 = vld [vmem:[%s6 + $0x38] sm:$0xf]
        %v728 = vld [vmem:[%s6 + $0x3c] sm:$0xf]
        %v729 = vld [vmem:[%s7] sm:$0x1]
        %v730 = vld [vmem:[%s8] sm:$0xf]
        %v731 = vld [vmem:[%s8 + $0x4] sm:$0xf]
        %v732 = vld [vmem:[%s8 + $0x8] sm:$0xf]
        %v733 = vld [vmem:[%s8 + $0xc] sm:$0xf]
        %v734 = vld [vmem:[%s8 + $0x10] sm:$0xf]
        %v735 = vld [vmem:[%s8 + $0x14] sm:$0xf]
        %v736 = vld [vmem:[%s8 + $0x18] sm:$0xf]
        %v737 = vld [vmem:[%s8 + $0x1c] sm:$0xf]
        %v738 = vld [vmem:[%s8 + $0x20] sm:$0xf]
        %v739 = vld [vmem:[%s8 + $0x24] sm:$0xf]
        %v740 = vld [vmem:[%s8 + $0x28] sm:$0xf]
        %v741 = vld [vmem:[%s8 + $0x2c] sm:$0xf]
        %v742 = vld [vmem:[%s8 + $0x30] sm:$0xf]
        %v743 = vld [vmem:[%s8 + $0x34] sm:$0xf]
        %v744 = vld [vmem:[%s8 + $0x38] sm:$0xf]
        %v745 = vld [vmem:[%s8 + $0x3c] sm:$0xf]
        %v746 = vld [vmem:[%s9] sm:$0x1]
        %v747 = vpack.c.bf16 %v712, %v711
        %v749 = vlaneseq
        %v750 = vshrl.u32 %v749, 7
        %v751 = vsub.s32 0, %v750
        %v752 = vrot.slane %v729, %v751
        %v770 = vunpack.c.l.b16 %v713
        %v771 = vunpack.c.l.b16 %v714
        %v772 = vunpack.c.l.b16 %v715
        %v773 = vunpack.c.l.b16 %v716
        %v774 = vunpack.c.l.b16 %v717
        %v775 = vunpack.c.l.b16 %v718
        %v776 = vunpack.c.l.b16 %v719
        %v777 = vunpack.c.l.b16 %v720
        %v778 = vunpack.c.l.b16 %v721
        %v779 = vunpack.c.l.b16 %v722
        %v780 = vunpack.c.l.b16 %v723
        %v781 = vunpack.c.l.b16 %v724
        %v782 = vunpack.c.l.b16 %v725
        %v783 = vunpack.c.l.b16 %v726
        %v784 = vunpack.c.l.b16 %v727
        %v785 = vunpack.c.l.b16 %v728
        %v786 = vpack.c.b16 %v771, %v770
        %v787 = vpack.c.b16 %v773, %v772
        %v788 = vpack.c.b16 %v775, %v774
        %v789 = vpack.c.b16 %v777, %v776
        %v790 = vpack.c.b16 %v779, %v778
        %v791 = vpack.c.b16 %v781, %v780
        %v792 = vpack.c.b16 %v783, %v782
        %v793 = vpack.c.b16 %v785, %v784
        %802 = vmatprep.subr.bf16.mxu0 0
        %803 = vmatpush1.bf16.msra.mxu0 %v786
        %804 = vmatprep.subr.bf16.mxu0 0
        %805 = vmatpush1.bf16.msra.mxu0 %v787
        %806 = vmatprep.subr.bf16.mxu0 0
        %807 = vmatpush1.bf16.msra.mxu0 %v788
        %808 = vmatprep.subr.bf16.mxu0 0
        %809 = vmatpush1.bf16.msra.mxu0 %v789
        %810 = vmatprep.subr.bf16.mxu0 0
        %811 = vmatpush1.bf16.msra.mxu0 %v790
        %812 = vmatprep.subr.bf16.mxu0 0
        %813 = vmatpush1.bf16.msra.mxu0 %v791
        %814 = vmatprep.subr.bf16.mxu0 0
        %815 = vmatpush1.bf16.msra.mxu0 %v792
        %816 = vmatprep.subr.bf16.mxu0 0
        %817 = vmatpush1.bf16.msra.mxu0 %v793
        %818 = vmatprep.subr.bf16.mxu0 0
        %819 = vmatpush1.bf16.msra.mxu0 0
        %820 = vmatprep.subr.bf16.mxu0 0
        %821 = vmatpush1.bf16.msra.mxu0 0
        %822 = vmatprep.subr.bf16.mxu0 0
        %823 = vmatpush1.bf16.msra.mxu0 0
        %824 = vmatprep.subr.bf16.mxu0 0
        %825 = vmatpush1.bf16.msra.mxu0 0
        %826 = vmatprep.subr.bf16.mxu0 0
        %827 = vmatpush1.bf16.msra.mxu0 0
        %828 = vmatprep.subr.bf16.mxu0 0
        %829 = vmatpush1.bf16.msra.mxu0 0
        %830 = vmatprep.subr.bf16.mxu0 0
        %831 = vmatpush1.bf16.msra.mxu0 0
        %832 = vmatprep.subr.bf16.mxu0 0
        %833 = vmatpush1.bf16.msra.mxu0 0
        %834 = vmatprep.mubr.bf16.mxu0 0
        %835 = vmatmul.mubr.bf16.gmra.mrb[0].mxu0 %v747
        %v836 = vpop.f32.mrb[0].mxu0
        %v837 = vadd.f32 %v752, %v836
        %v838 = vpop.f32.mrb[0].mxu0
        %v839 = vpop.f32.mrb[0].mxu0
        %v840 = vadd.f32 %v752, %v839
        %v841 = vpop.f32.mrb[0].mxu0
        %842 = vdwg.mxu0
        %v843 = vmax.f32 %v837, 0.0
        %v844 = vmax.f32 %v840, 0.0
        %v845 = vpack.c.bf16 %v844, %v843
        %v847 = vlaneseq
        %v848 = vshrl.u32 %v847, 7
        %v849 = vsub.s32 0, %v848
        %v850 = vrot.slane %v746, %v849
        %v868 = vunpack.c.l.b16 %v730
        %v869 = vunpack.c.l.b16 %v731
        %v870 = vunpack.c.l.b16 %v732
        %v871 = vunpack.c.l.b16 %v733
        %v872 = vunpack.c.l.b16 %v734
        %v873 = vunpack.c.l.b16 %v735
        %v874 = vunpack.c.l.b16 %v736
        %v875 = vunpack.c.l.b16 %v737
        %v876 = vunpack.c.l.b16 %v738
        %v877 = vunpack.c.l.b16 %v739
        %v878 = vunpack.c.l.b16 %v740
        %v879 = vunpack.c.l.b16 %v741
        %v880 = vunpack.c.l.b16 %v742
        %v881 = vunpack.c.l.b16 %v743
        %v882 = vunpack.c.l.b16 %v744
        %v883 = vunpack.c.l.b16 %v745
        %v884 = vpack.c.b16 %v869, %v868
        %v885 = vpack.c.b16 %v871, %v870
        %v886 = vpack.c.b16 %v873, %v872
        %v887 = vpack.c.b16 %v875, %v874
        %v888 = vpack.c.b16 %v877, %v876
        %v889 = vpack.c.b16 %v879, %v878
        %v890 = vpack.c.b16 %v881, %v880
        %v891 = vpack.c.b16 %v883, %v882
        %900 = vmatprep.subr.bf16.mxu0 0
        %901 = vmatpush1.bf16.msra.mxu0 %v884
        %902 = vmatprep.subr.bf16.mxu0 0
        %903 = vmatpush1.bf16.msra.mxu0 %v885
        %904 = vmatprep.subr.bf16.mxu0 0
        %905 = vmatpush1.bf16.msra.mxu0 %v886
        %906 = vmatprep.subr.bf16.mxu0 0
        %907 = vmatpush1.bf16.msra.mxu0 %v887
        %908 = vmatprep.subr.bf16.mxu0 0
        %909 = vmatpush1.bf16.msra.mxu0 %v888
        %910 = vmatprep.subr.bf16.mxu0 0
        %911 = vmatpush1.bf16.msra.mxu0 %v889
        %912 = vmatprep.subr.bf16.mxu0 0
        %913 = vmatpush1.bf16.msra.mxu0 %v890
        %914 = vmatprep.subr.bf16.mxu0 0
        %915 = vmatpush1.bf16.msra.mxu0 %v891
        %916 = vmatprep.subr.bf16.mxu0 0
        %917 = vmatpush1.bf16.msra.mxu0 0
        %918 = vmatprep.subr.bf16.mxu0 0
        %919 = vmatpush1.bf16.msra.mxu0 0
        %920 = vmatprep.subr.bf16.mxu0 0
        %921 = vmatpush1.bf16.msra.mxu0 0
        %922 = vmatprep.subr.bf16.mxu0 0
        %923 = vmatpush1.bf16.msra.mxu0 0
        %924 = vmatprep.subr.bf16.mxu0 0
        %925 = vmatpush1.bf16.msra.mxu0 0
        %926 = vmatprep.subr.bf16.mxu0 0
        %927 = vmatpush1.bf16.msra.mxu0 0
        %928 = vmatprep.subr.bf16.mxu0 0
        %929 = vmatpush1.bf16.msra.mxu0 0
        %930 = vmatprep.subr.bf16.mxu0 0
        %931 = vmatpush1.bf16.msra.mxu0 0
        %932 = vmatprep.mubr.bf16.mxu0 0
        %933 = vmatmul.mubr.bf16.gmra.mrb[0].mxu0 %v845
        %v934 = vpop.f32.mrb[0].mxu0
        %v935 = vadd.f32 %v850, %v934
        %v936 = vpop.f32.mrb[0].mxu0
        %v937 = vpop.f32.mrb[0].mxu0
        %v938 = vadd.f32 %v850, %v937
        %v939 = vpop.f32.mrb[0].mxu0
        %940 = vdwg.mxu0
        %v941 = vmax.f32 %v935, 0.0
        %v942 = vmax.f32 %v938, 0.0
        %v943 = vmul.f32 %v709, %v941
        %v944 = vmul.f32 %v710, %v942
        %vm945 = vcmask 523264
        %v947 = vsel %vm945, 1.0, 0
        %v950 = vsel %vm945, %v943, 0
        %v953 = vsel %vm945, %v944, 0
        %955 = vmatprep.subr.mxu0 0.0
        %956 = vmatpush1.xpose.msra.mxu0 %v950
        %957 = vmatprep.subr.mxu0 0.0
        %958 = vmatpush1.xpose.msra.mxu0 %v953
        %959 = vmatprep.subr.mxu0 0.0
        %960 = vmatpush1.xpose.msra.mxu0 0.0
        %961 = vmatprep.subr.mxu0 0.0
        %962 = vmatpush1.xpose.msra.mxu0 0.0
        %963 = vmatprep.subr.mxu0 0.0
        %964 = vmatpush1.xpose.msra.mxu0 0.0
        %965 = vmatprep.subr.mxu0 0.0
        %966 = vmatpush1.xpose.msra.mxu0 0.0
        %967 = vmatprep.subr.mxu0 0.0
        %968 = vmatpush1.xpose.msra.mxu0 0.0
        %969 = vmatprep.subr.mxu0 0.0
        %970 = vmatpush1.xpose.msra.mxu0 0.0
        %971 = vmatprep.subr.mxu0 0.0
        %972 = vmatpush1.xpose.msra.mxu0 0.0
        %973 = vmatprep.subr.mxu0 0.0
        %974 = vmatpush1.xpose.msra.mxu0 0.0
        %975 = vmatprep.subr.mxu0 0.0
        %976 = vmatpush1.xpose.msra.mxu0 0.0
        %977 = vmatprep.subr.mxu0 0.0
        %978 = vmatpush1.xpose.msra.mxu0 0.0
        %979 = vmatprep.subr.mxu0 0.0
        %980 = vmatpush1.xpose.msra.mxu0 0.0
        %981 = vmatprep.subr.mxu0 0.0
        %982 = vmatpush1.xpose.msra.mxu0 0.0
        %983 = vmatprep.subr.mxu0 0.0
        %984 = vmatpush1.xpose.msra.mxu0 0.0
        %985 = vmatprep.subr.mxu0 0.0
        %986 = vmatpush1.xpose.msra.mxu0 0.0
        %987 = vmatprep.subr.mxu0 0.0
        %988 = vmatpush1.xpose.msra.mxu0 0.0
        %989 = vmatprep.subr.mxu0 0.0
        %990 = vmatpush1.xpose.msra.mxu0 0.0
        %991 = vmatprep.subr.mxu0 0.0
        %992 = vmatpush1.xpose.msra.mxu0 0.0
        %993 = vmatprep.subr.mxu0 0.0
        %994 = vmatpush1.xpose.msra.mxu0 0.0
        %995 = vmatprep.subr.mxu0 0.0
        %996 = vmatpush1.xpose.msra.mxu0 0.0
        %997 = vmatprep.subr.mxu0 0.0
        %998 = vmatpush1.xpose.msra.mxu0 0.0
        %999 = vmatprep.subr.mxu0 0.0
        %1000 = vmatpush1.xpose.msra.mxu0 0.0
        %1001 = vmatprep.subr.mxu0 0.0
        %1002 = vmatpush1.xpose.msra.mxu0 0.0
        %1003 = vmatprep.subr.mxu0 0.0
        %1004 = vmatpush1.xpose.msra.mxu0 0.0
        %1005 = vmatprep.subr.mxu0 0.0
        %1006 = vmatpush1.xpose.msra.mxu0 0.0
        %1007 = vmatprep.subr.mxu0 0.0
        %1008 = vmatpush1.xpose.msra.mxu0 0.0
        %1009 = vmatprep.subr.mxu0 0.0
        %1010 = vmatpush1.xpose.msra.mxu0 0.0
        %1011 = vmatprep.subr.mxu0 0.0
        %1012 = vmatpush1.xpose.msra.mxu0 0.0
        %1013 = vmatprep.subr.mxu0 0.0
        %1014 = vmatpush1.xpose.msra.mxu0 0.0
        %1015 = vmatprep.subr.mxu0 0.0
        %1016 = vmatpush1.xpose.msra.mxu0 0.0
        %1017 = vmatprep.subr.mxu0 0.0
        %1018 = vmatpush1.xpose.msra.mxu0 0.0
        %1019 = vmatprep.mubr.f32.mxu0 0.0
        %1020 = vmatmul.mubr.f32.gmra.mrb[0].mxu0 %v947
        %v1021 = vpop.f32.mrb[0].mxu0
        %v1022 = vadd.f32 0.0, %v1021
        %v1023 = vpop.f32.mrb[0].mxu0
        %1024 = vdwg.mxu0
        %vm1025 = vcmask 122880
        %1026 = vst.msk [vmem:[%s461] sm:$0x1] %vm1025, %v1022
        %v1027 = vld [vmem:[%s477] sm:$0x1]
        %v1028 = vmax.f32 %v1022, 0.0
        %v1029 = vmul.f32 %v1022, %v1027
        %v1030 = vsub.f32 %v1028, %v1029
        %v1031 = vand.u32 2147483647, %v1022
        %v1032 = vsub.f32 0.0, %v1031
        %v1033 = vmul.f32 %v1032, 1.442695
        %v1034 = vpow.pop %v1033
        %v1035 = vadd.f32 %v1034, 1.0
        %v1036 = vlog2.pop %v1035
        %v1037 = vmul.f32 %v1036, 0.6931472
        %v1038 = vmul.f32 -0.5, %v1034
        %v1039 = vadd.f32 %v1038, 1.0
        %v1040 = vmul.f32 %v1039, %v1034
        %v1041 = vand.u32 2147483647, %v1034
        %vm1042 = vcmp.lt.f32.partialorder %v1041, 0.0004427343
        %v1043 = vsel %vm1042, %v1040, %v1037
        %v1044 = vadd.f32 %v1030, %v1043
        %s1045 = smul.u32 %s33, 16
        %v1046 = vlaneseq
        %v1047 = vand.u32 %v1046, 127
        %v1048 = vstv %s1045
        %v1049 = vadd.s32 %v1048, %v1047
        %vm1050 = vcmp.lt.s32.totalorder %v1049, 40
        %v1051 = vsel %vm1050, %v1044, 0.0
        %1052 = vst.msk [vmem:[%s467] sm:$0x1] %vm1025, %v1051
        %s1053 = sand.u32 %s287, 1
        %s1054 = scalar_lea.sflag [#allocation4], %s1053
        %s1055 = sand.u32 %s287, 1
        %s1056 = scalar_lea.vmem [#allocation5], %s1055
        %s1057 = sand.u32 %s313, 1
        %s1058 = scalar_lea.sflag [#allocation7], %s1057
        %s1059 = sand.u32 %s313, 1
        %s1060 = scalar_lea.vmem [#allocation6], %s1059
        // Predicated region
        $region69: #{tpu_custom_call.1} parent=63 // pred_check
          %p1061 = pneg %p297
        $region70: #{tpu_custom_call.1} parent=63 // pred_check_branch
          %1063 = sbr.rel (%p1061) target = $region72
        $region71: #{tpu_custom_call.1} parent=63 // pred_region
          %s1065 = ssub.s32 16, 16
          %1066 = vsyncadd %s1054, %s1065
          %s1067 = smul.addr %s33, 16
          %s1068 = scalar_lea.hbm %s11, %s1067
          %s1070 = sshll.u32 %s1056, 4
          %s1071 = int_to_ptr.vmem [resolvable:$true] %s1070
          %1073 = dma.vmem_to_hbm [thread:$0]  %s1071, 16, %s1068, %s1054
        $region72: #{tpu_custom_call.1} parent=63 // pred_fallthru
          _
        // Predicated region
        $region73: #{tpu_custom_call.1} parent=63 // pred_check
          %p1074 = pneg %p323
        $region74: #{tpu_custom_call.1} parent=63 // pred_check_branch
          %1076 = sbr.rel (%p1074) target = $region76
        $region75: #{tpu_custom_call.1} parent=63 // pred_region
          %s1078 = ssub.s32 16, 16
          %1079 = vsyncadd %s1058, %s1078
          %s1080 = smul.addr %s33, 16
          %s1081 = scalar_lea.hbm %s12, %s1080
          %s1083 = sshll.u32 %s1060, 4
          %s1084 = int_to_ptr.vmem [resolvable:$true] %s1083
          %1086 = dma.vmem_to_hbm [thread:$0]  %s1084, 16, %s1081, %s1058
        $region76: #{tpu_custom_call.1} parent=63 // pred_fallthru
          _
      $region64: #{tpu_custom_call.1} parent=5 // pred_fallthru
        _
      %p1087 = scmp.le.s32.totalorder 2, %s28
      // Predicated region
      $region77: #{tpu_custom_call.1} parent=5 // pred_check
        %p1088 = pneg %p1087
      $region78: #{tpu_custom_call.1} parent=5 // pred_check_branch
        %1090 = sbr.rel (%p1088) target = $region80
      $region79: #{tpu_custom_call.1} parent=5 // pred_region
        %s1091 = ssub.s32 %s28, 2
        // Predicated region
        $region81: #{tpu_custom_call.1} parent=79 // pred_check
          %p1092 = pneg %p303
        $region82: #{tpu_custom_call.1} parent=79 // pred_check_branch
          %1094 = sbr.rel (%p1092) target = $region84
        $region83: #{tpu_custom_call.1} parent=79 // pred_region
          %s1095 = sand.u32 %s288, 1
          %s1096 = scalar_lea.sflag [#allocation4], %s1095
          %s1097 = sand.u32 %s288, 1
          %s1098 = scalar_lea.vmem [#allocation5], %s1097
          %1099 = dma.done %s1096, 16
        $region84: #{tpu_custom_call.1} parent=79 // pred_fallthru
          _
        // Predicated region
        $region85: #{tpu_custom_call.1} parent=79 // pred_check
          %p1100 = pneg %p329
        $region86: #{tpu_custom_call.1} parent=79 // pred_check_branch
          %1102 = sbr.rel (%p1100) target = $region88
        $region87: #{tpu_custom_call.1} parent=79 // pred_region
          %s1103 = sand.u32 %s314, 1
          %s1104 = scalar_lea.sflag [#allocation7], %s1103
          %s1105 = sand.u32 %s314, 1
          %s1106 = scalar_lea.vmem [#allocation6], %s1105
          %1107 = dma.done %s1104, 16
        $region88: #{tpu_custom_call.1} parent=79 // pred_fallthru
          _
      $region80: #{tpu_custom_call.1} parent=5 // pred_fallthru
        _
    $region6: #{tpu_custom_call.1} parent=1 // loop_footer
      %s32 = sadd.s32 1, %s28
    $region7: #{tpu_custom_call.1} parent=1 // loop_footer_branch
      %27 = sbr.rel target = $region3
    $region8: #{tpu_custom_call.1} parent=1 // loop_exit
      _
    %1108 = vsyncpa [#allocation3], 1
    %s1109 = scalar_lea.sflag [#allocation3], 1
    %1110 = vsyncpa %s1109, 1
    %1111 = vsyncpa [#allocation4], 1
    %s1112 = scalar_lea.sflag [#allocation4], 1
    %1113 = vsyncpa %s1112, 1
    %1114 = vsyncpa [#allocation7], 1
    %s1115 = scalar_lea.sflag [#allocation7], 1
    %1116 = vsyncpa %s1115, 1

</llo_original>
